<compile_context>
chip_gen: v6e
topology: v6e:2x2x1
jax: 0.10.0
libtpu: 0.0.40
codegen_flags: <defaults>
</compile_context>

<pallas_src>
import functools

import jax
import jax.numpy as jnp
from jax.experimental import pallas as pl
from jax.experimental.pallas import tpu as pltpu


def _round_up(n, m):
    return (n + m - 1) // m * m


def _ae_kernel(x_ref, p_ref, out_ref, *, meta):
    """Fused encoder+decoder on one batch tile.

    meta: static tuple of (row_offset, din, dout) per layer into the packed
    parameter buffer p_ref.  Rows [off, off+din) hold W (shape [din, dout]),
    row off+din holds the bias.
    """
    h = x_ref[...].astype(jnp.bfloat16)           # bf16 activations for MXU
    n_layers = len(meta)
    for li, (off, din, dout) in enumerate(meta):
        w = p_ref[off:off + din, :dout].astype(jnp.bfloat16)
        b = p_ref[off + din:off + din + 1, :dout]             # f32 (1, dout)
        z = jnp.dot(h, w, preferred_element_type=jnp.float32) + b
        if li == n_layers - 1:
            out_ref[...] = jax.nn.sigmoid(z).astype(out_ref.dtype)
        else:
            h = jnp.maximum(z, 0.0).astype(jnp.bfloat16)


def pack_params(params):
    """Pack all layer weights/biases into one f32 buffer [R_total, C].

    Each layer occupies an 8-row-aligned block: rows [0, din) = W[din, dout],
    row din = bias.  Returns (packed_array, static_meta).
    """
    layers = list(params["enc"]) + list(params["dec"])
    C = max(w.shape[1] for w, _ in layers)
    blocks, meta, off = [], [], 0
    for w, b in layers:
        din, dout = w.shape
        rows = _round_up(din + 1, 8)
        blk = jnp.zeros((rows, C), jnp.float32)
        blk = blk.at[:din, :dout].set(w.astype(jnp.float32))
        blk = blk.at[din, :dout].set(b.reshape(-1).astype(jnp.float32))
        blocks.append(blk)
        meta.append((off, din, dout))
        off += rows
    return jnp.concatenate(blocks, axis=0), tuple(meta)


@functools.partial(jax.jit, static_argnames=("meta", "block_b"))
def anomaly_detector_forward(x, packed, *, meta, block_b=512):
    """x: [B, input_dim] f32; packed/meta from pack_params."""
    B, D = x.shape
    # Batch tile: multiple of 8, no larger than (padded) batch.
    bb = _round_up(min(block_b, _round_up(B, 8)), 8)
    grid = pl.cdiv(B, bb)
    B_pad = grid * bb
    if B_pad != B:
        x = jnp.pad(x, ((0, B_pad - B), (0, 0)))
    R, C = packed.shape

    kernel = functools.partial(_ae_kernel, meta=meta)
    out = pl.pallas_call(
        kernel,
        out_shape=jax.ShapeDtypeStruct((B_pad, D), x.dtype),
        grid_spec=pltpu.PrefetchScalarGridSpec(
            num_scalar_prefetch=0,
            grid=(grid,),
            in_specs=[
                pl.BlockSpec((bb, D), lambda i: (i, 0)),     # batch tile
                pl.BlockSpec((R, C), lambda i: (0, 0)),      # packed params
            ],
            out_specs=pl.BlockSpec((bb, D), lambda i: (i, 0)),
        ),
        compiler_params=pltpu.CompilerParams(
            dimension_semantics=("parallel",)),
    )(x, packed)
    return out[:B] if B_pad != B else out


def init_params(key, input_dim):
    """Deterministic synthetic init. Linear(in,out) stored as W:[in,out], b:[1,out]."""
    dims_enc = [(input_dim, 16), (16, 8), (8, 4)]
    dims_dec = [(4, 8), (8, 16), (16, input_dim)]

    def make(key, dims):
        layers = []
        for (din, dout) in dims:
            key, kw, kb = jax.random.split(key, 3)
            scale = 1.0 / jnp.sqrt(din)
            w = jax.random.uniform(kw, (din, dout), jnp.float32, -scale, scale)
            b = jax.random.uniform(kb, (1, dout), jnp.float32, -scale, scale)
            layers.append((w, b))
        return key, layers

    key, enc = make(key, dims_enc)
    key, dec = make(key, dims_dec)
    return {"enc": enc, "dec": dec}


def reference_forward(x, params):
    """Pure f32 JAX reference matching the PyTorch module."""
    h = x
    for (w, b) in params["enc"]:
        h = jnp.maximum(h @ w + b, 0.0)
    for i, (w, b) in enumerate(params["dec"]):
        h = h @ w + b
        h = jax.nn.sigmoid(h) if i == 2 else jnp.maximum(h, 0.0)
    return h


if __name__ == "__main__":
    key = jax.random.PRNGKey(0)
    key, kx = jax.random.split(key)

    input_dim = 32  # args.input_dim
    params = init_params(key, input_dim)
    packed, meta = pack_params(params)

    # Small demo batch (single grid step).
    x_small = jax.random.normal(kx, (16, input_dim), jnp.float32)
    out_small = jax.block_until_ready(
        anomaly_detector_forward(x_small, packed, meta=meta, block_b=512))
    ref_small = reference_forward(x_small, params)
    assert out_small.shape == x_small.shape
    # bf16 matmul inputs (f32 accumulate) -> loosened tolerance vs f32 ref.
    assert jnp.allclose(out_small, ref_small, atol=2e-2, rtol=2e-2), \
        "mismatch vs reference (small batch)"

    # Ragged batch, multi-step grid: exercises cdiv + tail padding path.
    key, kx2 = jax.random.split(key)
    x_big = jax.random.normal(kx2, (600, input_dim), jnp.float32)
    out_big = jax.block_until_ready(
        anomaly_detector_forward(x_big, packed, meta=meta, block_b=256))
    ref_big = reference_forward(x_big, params)
    assert out_big.shape == x_big.shape
    assert jnp.allclose(out_big, ref_big, atol=2e-2, rtol=2e-2), \
        "mismatch vs reference (ragged batch)"

    print("KERNEL_OK")
</pallas_src>

<mosaic_0001>
module attributes {stable_mosaic.version = 11 : i64} {
  func.func @_ae_kernel(%arg0: i32, %arg1: memref<16x32xf32, #tpu.memory_space<vmem>>, %arg2: memref<128x32xf32, #tpu.memory_space<vmem>>, %arg3: memref<16x32xf32, #tpu.memory_space<vmem>>) attributes {dimension_semantics = [#tpu.dimension_semantics<parallel>], iteration_bounds = array<i64: 1>, scalar_prefetch = 0 : i64, scratch_operands = 0 : i64, tpu.core_type = #tpu.core_type<tc>, window_params = [{transform_indices = @transform_0, window_bounds = array<i64: 16, 32>}, {pipeline_mode = #tpu.pipeline_mode<synchronous>, transform_indices = @transform_1, window_bounds = array<i64: 128, 32>}, {transform_indices = @transform_2, window_bounds = array<i64: 16, 32>}]} {
    %c0 = arith.constant 0 : index
    %c0_0 = arith.constant 0 : index
    %0 = vector.load %arg1[%c0, %c0_0] : memref<16x32xf32, #tpu.memory_space<vmem>>, vector<16x32xf32>
    %1 = arith.truncf %0 : vector<16x32xf32> to vector<16x32xbf16>
    %c0_1 = arith.constant 0 : index
    %c0_2 = arith.constant 0 : index
    %2 = vector.load %arg2[%c0_1, %c0_2] : memref<128x32xf32, #tpu.memory_space<vmem>>, vector<32x16xf32>
    %3 = arith.truncf %2 : vector<32x16xf32> to vector<32x16xbf16>
    %c32 = arith.constant 32 : index
    %c0_3 = arith.constant 0 : index
    %4 = vector.load %arg2[%c32, %c0_3] : memref<128x32xf32, #tpu.memory_space<vmem>>, vector<1x16xf32>
    %cst = arith.constant dense<0.000000e+00> : vector<16x16xf32>
    %5 = tpu.matmul %1, %3, %cst {dimension_numbers = #tpu.dot_dimension_numbers<[1], [0], [0], [1], [0, 0, 1, 1], [], []>} : vector<16x32xbf16>, vector<32x16xbf16>, vector<16x16xf32> -> vector<16x16xf32>
    %6 = vector.broadcast %4 : vector<1x16xf32> to vector<16x16xf32>
    %7 = arith.addf %5, %6 : vector<16x16xf32>
    %cst_4 = arith.constant 0.000000e+00 : f32
    %8 = vector.broadcast %cst_4 : f32 to vector<16x16xf32>
    %9 = arith.maximumf %7, %8 : vector<16x16xf32>
    %10 = arith.truncf %9 : vector<16x16xf32> to vector<16x16xbf16>
    %c40 = arith.constant 40 : index
    %c0_5 = arith.constant 0 : index
    %11 = vector.load %arg2[%c40, %c0_5] : memref<128x32xf32, #tpu.memory_space<vmem>>, vector<16x8xf32>
    %12 = arith.truncf %11 : vector<16x8xf32> to vector<16x8xbf16>
    %c56 = arith.constant 56 : index
    %c0_6 = arith.constant 0 : index
    %13 = vector.load %arg2[%c56, %c0_6] : memref<128x32xf32, #tpu.memory_space<vmem>>, vector<1x8xf32>
    %cst_7 = arith.constant dense<0.000000e+00> : vector<16x8xf32>
    %14 = tpu.matmul %10, %12, %cst_7 {dimension_numbers = #tpu.dot_dimension_numbers<[1], [0], [0], [1], [0, 0, 1, 1], [], []>} : vector<16x16xbf16>, vector<16x8xbf16>, vector<16x8xf32> -> vector<16x8xf32>
    %15 = vector.broadcast %13 : vector<1x8xf32> to vector<16x8xf32>
    %16 = arith.addf %14, %15 : vector<16x8xf32>
    %cst_8 = arith.constant 0.000000e+00 : f32
    %17 = vector.broadcast %cst_8 : f32 to vector<16x8xf32>
    %18 = arith.maximumf %16, %17 : vector<16x8xf32>
    %19 = arith.truncf %18 : vector<16x8xf32> to vector<16x8xbf16>
    %c64 = arith.constant 64 : index
    %c0_9 = arith.constant 0 : index
    %20 = vector.load %arg2[%c64, %c0_9] : memref<128x32xf32, #tpu.memory_space<vmem>>, vector<8x4xf32>
    %21 = arith.truncf %20 : vector<8x4xf32> to vector<8x4xbf16>
    %c72 = arith.constant 72 : index
    %c0_10 = arith.constant 0 : index
    %22 = vector.load %arg2[%c72, %c0_10] : memref<128x32xf32, #tpu.memory_space<vmem>>, vector<1x4xf32>
    %cst_11 = arith.constant dense<0.000000e+00> : vector<16x4xf32>
    %23 = tpu.matmul %19, %21, %cst_11 {dimension_numbers = #tpu.dot_dimension_numbers<[1], [0], [0], [1], [0, 0, 1, 1], [], []>} : vector<16x8xbf16>, vector<8x4xbf16>, vector<16x4xf32> -> vector<16x4xf32>
    %24 = vector.broadcast %22 : vector<1x4xf32> to vector<16x4xf32>
    %25 = arith.addf %23, %24 : vector<16x4xf32>
    %cst_12 = arith.constant 0.000000e+00 : f32
    %26 = vector.broadcast %cst_12 : f32 to vector<16x4xf32>
    %27 = arith.maximumf %25, %26 : vector<16x4xf32>
    %28 = arith.truncf %27 : vector<16x4xf32> to vector<16x4xbf16>
    %c80 = arith.constant 80 : index
    %c0_13 = arith.constant 0 : index
    %29 = vector.load %arg2[%c80, %c0_13] : memref<128x32xf32, #tpu.memory_space<vmem>>, vector<4x8xf32>
    %30 = arith.truncf %29 : vector<4x8xf32> to vector<4x8xbf16>
    %c84 = arith.constant 84 : index
    %c0_14 = arith.constant 0 : index
    %31 = vector.load %arg2[%c84, %c0_14] : memref<128x32xf32, #tpu.memory_space<vmem>>, vector<1x8xf32>
    %cst_15 = arith.constant dense<0.000000e+00> : vector<16x8xf32>
    %32 = tpu.matmul %28, %30, %cst_15 {dimension_numbers = #tpu.dot_dimension_numbers<[1], [0], [0], [1], [0, 0, 1, 1], [], []>} : vector<16x4xbf16>, vector<4x8xbf16>, vector<16x8xf32> -> vector<16x8xf32>
    %33 = vector.broadcast %31 : vector<1x8xf32> to vector<16x8xf32>
    %34 = arith.addf %32, %33 : vector<16x8xf32>
    %cst_16 = arith.constant 0.000000e+00 : f32
    %35 = vector.broadcast %cst_16 : f32 to vector<16x8xf32>
    %36 = arith.maximumf %34, %35 : vector<16x8xf32>
    %37 = arith.truncf %36 : vector<16x8xf32> to vector<16x8xbf16>
    %c88 = arith.constant 88 : index
    %c0_17 = arith.constant 0 : index
    %38 = vector.load %arg2[%c88, %c0_17] : memref<128x32xf32, #tpu.memory_space<vmem>>, vector<8x16xf32>
    %39 = arith.truncf %38 : vector<8x16xf32> to vector<8x16xbf16>
    %c96 = arith.constant 96 : index
    %c0_18 = arith.constant 0 : index
    %40 = vector.load %arg2[%c96, %c0_18] : memref<128x32xf32, #tpu.memory_space<vmem>>, vector<1x16xf32>
    %cst_19 = arith.constant dense<0.000000e+00> : vector<16x16xf32>
    %41 = tpu.matmul %37, %39, %cst_19 {dimension_numbers = #tpu.dot_dimension_numbers<[1], [0], [0], [1], [0, 0, 1, 1], [], []>} : vector<16x8xbf16>, vector<8x16xbf16>, vector<16x16xf32> -> vector<16x16xf32>
    %42 = vector.broadcast %40 : vector<1x16xf32> to vector<16x16xf32>
    %43 = arith.addf %41, %42 : vector<16x16xf32>
    %cst_20 = arith.constant 0.000000e+00 : f32
    %44 = vector.broadcast %cst_20 : f32 to vector<16x16xf32>
    %45 = arith.maximumf %43, %44 : vector<16x16xf32>
    %46 = arith.truncf %45 : vector<16x16xf32> to vector<16x16xbf16>
    %c104 = arith.constant 104 : index
    %c0_21 = arith.constant 0 : index
    %47 = vector.load %arg2[%c104, %c0_21] : memref<128x32xf32, #tpu.memory_space<vmem>>, vector<16x32xf32>
    %48 = arith.truncf %47 : vector<16x32xf32> to vector<16x32xbf16>
    %c120 = arith.constant 120 : index
    %c0_22 = arith.constant 0 : index
    %49 = vector.load %arg2[%c120, %c0_22] : memref<128x32xf32, #tpu.memory_space<vmem>>, vector<1x32xf32>
    %cst_23 = arith.constant dense<0.000000e+00> : vector<16x32xf32>
    %50 = tpu.matmul %46, %48, %cst_23 {dimension_numbers = #tpu.dot_dimension_numbers<[1], [0], [0], [1], [0, 0, 1, 1], [], []>} : vector<16x16xbf16>, vector<16x32xbf16>, vector<16x32xf32> -> vector<16x32xf32>
    %51 = vector.broadcast %49 : vector<1x32xf32> to vector<16x32xf32>
    %52 = arith.addf %50, %51 : vector<16x32xf32>
    %53 = arith.negf %52 : vector<16x32xf32>
    %54 = math.exp %53 : vector<16x32xf32>
    %cst_24 = arith.constant 1.000000e+00 : f32
    %55 = vector.broadcast %cst_24 : f32 to vector<16x32xf32>
    %56 = arith.addf %55, %54 : vector<16x32xf32>
    %57 = arith.divf %55, %56 : vector<16x32xf32>
    %c0_25 = arith.constant 0 : index
    %c0_26 = arith.constant 0 : index
    %58 = vector.load %arg3[%c0_25, %c0_26] : memref<16x32xf32, #tpu.memory_space<vmem>>, vector<16x32xf32>
    tpu.vector_store %arg3[%c0_25, %c0_26], %57 {strides = array<i32>} : memref<16x32xf32, #tpu.memory_space<vmem>>, vector<16x32xf32>,
    return
  }
  func.func @transform_0(%arg0: i32) -> (i32, i32) {
    %c0_i32 = arith.constant 0 : i32
    %c0_i32_0 = arith.constant 0 : i32
    return %arg0, %c0_i32 : i32, i32
  }
  func.func @transform_1(%arg0: i32) -> (i32, i32) {
    %c0_i32 = arith.constant 0 : i32
    %c0_i32_0 = arith.constant 0 : i32
    %c0_i32_1 = arith.constant 0 : i32
    return %c0_i32, %c0_i32_0 : i32, i32
  }
  func.func @transform_2(%arg0: i32) -> (i32, i32) {
    %c0_i32 = arith.constant 0 : i32
    %c0_i32_0 = arith.constant 0 : i32
    return %arg0, %c0_i32 : i32, i32
  }
}

</mosaic_0001>

<llo_original>
// kernel: anomaly_detector_forward.1
$region0: #{anomaly_detector_forward.1}
  #allocation0 [shape = 'u32[]', space=smem, size = 0x4, offset = 0x4, fixed_abs, tag = 'smem constant byte address 0x4 - core index']
  #allocation1 [shape = 'u32[144,128]{1,0:T(1,128)}', space=vmem, size = 0x12000, scoped, tag = 'internal scratch']
  %s0 = inlined_call_operand.vmem [shape: f32[16,32], index: 0, kind: input, shape index: {}]
  %s1 = inlined_call_operand.vmem [shape: f32[128,32], index: 1, kind: input, shape index: {}]
  %s2 = inlined_call_operand.hbm [shape: f32[16,32], index: 2, kind: output, shape index: {}]
  %s3 = sld [smem:[#allocation0]]
  $region18: #{anomaly_detector_forward.1} parent=0
    _
  %s5 = ssub.s32 1, %s3
  %s6 = scalar_select 0, %s5, %s3
  $region1: #{anomaly_detector_forward.1} parent=0
    #allocation2 [shape = 'u8[8192]{0}', space=vmem, size = 0x2000, scoped, tag = 'output window, operand 0, single buffered']
    #allocation3 [shape = 's32[1]{0}', space=sflag, size = 0x4, scoped, tag = 'scoped memory for anomaly_detector_forward.1']
    %7 = vsyncpa [#allocation3], 0
    // Predicated region
    $region2: #{anomaly_detector_forward.1} parent=1 // pred_check
      _
    $region3: #{anomaly_detector_forward.1} parent=1 // pred_check_branch
      %9 = sbr.rel (0) target = $region5
    $region4: #{anomaly_detector_forward.1} parent=1 // pred_region
      _
    $region5: #{anomaly_detector_forward.1} parent=1 // pred_fallthru
      _
    // Predicated region
    $region6: #{anomaly_detector_forward.1} parent=1 // pred_check
      _
    $region7: #{anomaly_detector_forward.1} parent=1 // pred_check_branch
      %11 = sbr.rel (0) target = $region9
    $region8: #{anomaly_detector_forward.1} parent=1 // pred_region
      _
    $region9: #{anomaly_detector_forward.1} parent=1 // pred_fallthru
      _
    %v13 = vld [vmem:[%s0] sm:$0xff]
    %v14 = vld [vmem:[%s0 + $0x8] sm:$0xff]
    %v15 = vpack.c.bf16 %v14, %v13
    %v16 = vld [vmem:[%s1] sm:$0xff]
    %v17 = vld [vmem:[%s1 + $0x8] sm:$0xff]
    %v18 = vld [vmem:[%s1 + $0x10] sm:$0xff]
    %v19 = vld [vmem:[%s1 + $0x18] sm:$0xff]
    %v20 = vpack.c.bf16 %v17, %v16
    %v21 = vpack.c.bf16 %v19, %v18
    %v22 = vld [vmem:[%s1 + $0x20] sm:$0x1]
    %v23 = vlaneseq
    %v24 = vshrl.u32 %v23, 7
    %v25 = vsub.s32 0, %v24
    %v26 = vrot.slane %v22, %v25
    %vm27 = vcmask 261120
    %v29 = vsel %vm27, %v15, 0
    %31 = vmatprep.subr.bf16.mxu0 0
    %32 = vmatpush1.bf16.msra.mxu0 0
    %33 = vmatprep.subr.bf16.mxu0 0
    %34 = vmatpush1.bf16.msra.mxu0 0
    %35 = vmatprep.subr.bf16.mxu0 0
    %36 = vmatpush1.bf16.msra.mxu0 0
    %37 = vmatprep.subr.bf16.mxu0 0
    %38 = vmatpush1.bf16.msra.mxu0 0
    %39 = vmatprep.subr.bf16.mxu0 0
    %40 = vmatpush1.bf16.msra.mxu0 0
    %41 = vmatprep.subr.bf16.mxu0 0
    %42 = vmatpush1.bf16.msra.mxu0 0
    %43 = vmatprep.subr.bf16.mxu0 0
    %44 = vmatpush1.bf16.msra.mxu0 %v21
    %45 = vmatprep.subr.bf16.mxu0 0
    %46 = vmatpush1.bf16.msra.mxu0 %v20
    %47 = vmatprep.subr.bf16.mxu0 0
    %48 = vmatpush2.bf16.msra.mxu0 0
    %49 = vmatprep.subr.bf16.mxu0 0
    %50 = vmatpush2.bf16.msra.mxu0 0
    %51 = vmatprep.subr.bf16.mxu0 0
    %52 = vmatpush2.bf16.msra.mxu0 0
    %53 = vmatprep.subr.bf16.mxu0 0
    %54 = vmatpush2.bf16.msra.mxu0 0
    %55 = vmatprep.subr.bf16.mxu0 0
    %56 = vmatpush2.bf16.msra.mxu0 0
    %57 = vmatprep.subr.bf16.mxu0 0
    %58 = vmatpush2.bf16.msra.mxu0 0
    %59 = vmatprep.subr.bf16.mxu0 0
    %60 = vmatpush2.bf16.msra.mxu0 0
    %61 = vmatprep.subr.bf16.mxu0 0
    %62 = vmatpush2.bf16.msra.mxu0 0
    %63 = vmatprep.mubr.bf16.mxu0 0
    %64 = vmatmul.mubr.bf16.gmra.mxu0 %v29
    %v65 = vpop.f32.mrf.mxu0
    %v66 = vadd.f32 %v26, %v65
    %v67 = vpop.f32.mrf.mxu0
    %v68 = vpop.f32.mrf.mxu0
    %v69 = vadd.f32 %v26, %v68
    %v70 = vpop.f32.mrf.mxu0
    %71 = vdwg.mxu0
    %v72 = vmax.f32 %v66, 0.0
    %v73 = vmax.f32 %v69, 0.0
    %v74 = vpack.c.bf16 %v73, %v72
    %v75 = vld [vmem:[%s1 + $0x28] sm:$0xff]
    %v76 = vld [vmem:[%s1 + $0x30] sm:$0xff]
    %v77 = vpack.c.bf16 %v76, %v75
    %v78 = vld [vmem:[%s1 + $0x38] sm:$0x1]
    %v79 = vlaneseq
    %v80 = vshrl.u32 %v79, 7
    %v81 = vsub.s32 0, %v80
    %v82 = vrot.slane %v78, %v81
    %vm83 = vcmask 130048
    %v85 = vsel %vm83, %v74, 0
    %87 = vmatprep.subr.bf16.mxu0 0
    %88 = vmatpush1.bf16.msra.mxu0 0
    %89 = vmatprep.subr.bf16.mxu0 0
    %90 = vmatpush1.bf16.msra.mxu0 0
    %91 = vmatprep.subr.bf16.mxu0 0
    %92 = vmatpush1.bf16.msra.mxu0 0
    %93 = vmatprep.subr.bf16.mxu0 0
    %94 = vmatpush1.bf16.msra.mxu0 0
    %95 = vmatprep.subr.bf16.mxu0 0
    %96 = vmatpush1.bf16.msra.mxu0 0
    %97 = vmatprep.subr.bf16.mxu0 0
    %98 = vmatpush1.bf16.msra.mxu0 0
    %99 = vmatprep.subr.bf16.mxu0 0
    %100 = vmatpush1.bf16.msra.mxu0 0
    %101 = vmatprep.subr.bf16.mxu0 0
    %102 = vmatpush1.bf16.msra.mxu0 %v77
    %103 = vmatprep.subr.bf16.mxu0 0
    %104 = vmatpush2.bf16.msra.mxu0 0
    %105 = vmatprep.subr.bf16.mxu0 0
    %106 = vmatpush2.bf16.msra.mxu0 0
    %107 = vmatprep.subr.bf16.mxu0 0
    %108 = vmatpush2.bf16.msra.mxu0 0
    %109 = vmatprep.subr.bf16.mxu0 0
    %110 = vmatpush2.bf16.msra.mxu0 0
    %111 = vmatprep.subr.bf16.mxu0 0
    %112 = vmatpush2.bf16.msra.mxu0 0
    %113 = vmatprep.subr.bf16.mxu0 0
    %114 = vmatpush2.bf16.msra.mxu0 0
    %115 = vmatprep.subr.bf16.mxu0 0
    %116 = vmatpush2.bf16.msra.mxu0 0
    %117 = vmatprep.subr.bf16.mxu0 0
    %118 = vmatpush2.bf16.msra.mxu0 0
    %119 = vmatprep.mubr.bf16.mxu0 0
    %120 = vmatmul.mubr.bf16.gmra.mxu0 %v85
    %v121 = vpop.f32.mrf.mxu0
    %v122 = vadd.f32 %v82, %v121
    %v123 = vpop.f32.mrf.mxu0
    %v124 = vpop.f32.mrf.mxu0
    %v125 = vadd.f32 %v82, %v124
    %v126 = vpop.f32.mrf.mxu0
    %127 = vdwg.mxu0
    %v128 = vmax.f32 %v122, 0.0
    %v129 = vmax.f32 %v125, 0.0
    %v130 = vpack.c.bf16 %v129, %v128
    %v131 = vld [vmem:[%s1 + $0x40] sm:$0xff]
    %v132 = vpack.c.bf16 %v131, %v131
    %v133 = vld [vmem:[%s1 + $0x48] sm:$0x1]
    %v134 = vlaneseq
    %v135 = vshrl.u32 %v134, 7
    %v136 = vsub.s32 0, %v135
    %v137 = vrot.slane %v133, %v136
    %vm138 = vcmask 64512
    %v140 = vsel %vm138, %v130, 0
    %vm142 = vcmask 1043456
    %v144 = vsel %vm142, %v132, 0
    %146 = vmatprep.subr.bf16.mxu0 0
    %147 = vmatpush1.bf16.msra.mxu0 0
    %148 = vmatprep.subr.bf16.mxu0 0
    %149 = vmatpush1.bf16.msra.mxu0 0
    %150 = vmatprep.subr.bf16.mxu0 0
    %151 = vmatpush1.bf16.msra.mxu0 0
    %152 = vmatprep.subr.bf16.mxu0 0
    %153 = vmatpush1.bf16.msra.mxu0 0
    %154 = vmatprep.subr.bf16.mxu0 0
    %155 = vmatpush1.bf16.msra.mxu0 0
    %156 = vmatprep.subr.bf16.mxu0 0
    %157 = vmatpush1.bf16.msra.mxu0 0
    %158 = vmatprep.subr.bf16.mxu0 0
    %159 = vmatpush1.bf16.msra.mxu0 0
    %160 = vmatprep.subr.bf16.mxu0 0
    %161 = vmatpush1.bf16.msra.mxu0 %v144
    %162 = vmatprep.subr.bf16.mxu0 0
    %163 = vmatpush2.bf16.msra.mxu0 0
    %164 = vmatprep.subr.bf16.mxu0 0
    %165 = vmatpush2.bf16.msra.mxu0 0
    %166 = vmatprep.subr.bf16.mxu0 0
    %167 = vmatpush2.bf16.msra.mxu0 0
    %168 = vmatprep.subr.bf16.mxu0 0
    %169 = vmatpush2.bf16.msra.mxu0 0
    %170 = vmatprep.subr.bf16.mxu0 0
    %171 = vmatpush2.bf16.msra.mxu0 0
    %172 = vmatprep.subr.bf16.mxu0 0
    %173 = vmatpush2.bf16.msra.mxu0 0
    %174 = vmatprep.subr.bf16.mxu0 0
    %175 = vmatpush2.bf16.msra.mxu0 0
    %176 = vmatprep.subr.bf16.mxu0 0
    %177 = vmatpush2.bf16.msra.mxu0 0
    %178 = vmatprep.mubr.bf16.mxu0 0
    %179 = vmatmul.mubr.bf16.gmra.mxu0 %v140
    %v180 = vpop.f32.mrf.mxu0
    %v181 = vadd.f32 %v137, %v180
    %v182 = vpop.f32.mrf.mxu0
    %v183 = vpop.f32.mrf.mxu0
    %v184 = vadd.f32 %v137, %v183
    %v185 = vpop.f32.mrf.mxu0
    %186 = vdwg.mxu0
    %v187 = vmax.f32 %v181, 0.0
    %v188 = vmax.f32 %v184, 0.0
    %v189 = vpack.c.bf16 %v188, %v187
    %v190 = vld [vmem:[%s1 + $0x50] sm:$0xf]
    %v191 = vpack.c.bf16 %v190, %v190
    %v192 = vld [vmem:[%s1 + $0x54] sm:$0x1]
    %v193 = vlaneseq
    %v194 = vshrl.u32 %v193, 7
    %v195 = vsub.s32 0, %v194
    %v196 = vrot.slane %v192, %v195
    %vm197 = vcmask 31744
    %v199 = vsel %vm197, %v189, 0
    %vm201 = vcmask 1041408
    %v203 = vsel %vm201, %v191, 0
    %205 = vmatprep.subr.bf16.mxu0 0
    %206 = vmatpush1.bf16.msra.mxu0 0
    %207 = vmatprep.subr.bf16.mxu0 0
    %208 = vmatpush1.bf16.msra.mxu0 0
    %209 = vmatprep.subr.bf16.mxu0 0
    %210 = vmatpush1.bf16.msra.mxu0 0
    %211 = vmatprep.subr.bf16.mxu0 0
    %212 = vmatpush1.bf16.msra.mxu0 0
    %213 = vmatprep.subr.bf16.mxu0 0
    %214 = vmatpush1.bf16.msra.mxu0 0
    %215 = vmatprep.subr.bf16.mxu0 0
    %216 = vmatpush1.bf16.msra.mxu0 0
    %217 = vmatprep.subr.bf16.mxu0 0
    %218 = vmatpush1.bf16.msra.mxu0 0
    %219 = vmatprep.subr.bf16.mxu0 0
    %220 = vmatpush1.bf16.msra.mxu0 %v203
    %221 = vmatprep.subr.bf16.mxu0 0
    %222 = vmatpush2.bf16.msra.mxu0 0
    %223 = vmatprep.subr.bf16.mxu0 0
    %224 = vmatpush2.bf16.msra.mxu0 0
    %225 = vmatprep.subr.bf16.mxu0 0
    %226 = vmatpush2.bf16.msra.mxu0 0
    %227 = vmatprep.subr.bf16.mxu0 0
    %228 = vmatpush2.bf16.msra.mxu0 0
    %229 = vmatprep.subr.bf16.mxu0 0
    %230 = vmatpush2.bf16.msra.mxu0 0
    %231 = vmatprep.subr.bf16.mxu0 0
    %232 = vmatpush2.bf16.msra.mxu0 0
    %233 = vmatprep.subr.bf16.mxu0 0
    %234 = vmatpush2.bf16.msra.mxu0 0
    %235 = vmatprep.subr.bf16.mxu0 0
    %236 = vmatpush2.bf16.msra.mxu0 0
    %237 = vmatprep.mubr.bf16.mxu0 0
    %238 = vmatmul.mubr.bf16.gmra.mxu0 %v199
    %v239 = vpop.f32.mrf.mxu0
    %v240 = vadd.f32 %v196, %v239
    %v241 = vpop.f32.mrf.mxu0
    %v242 = vpop.f32.mrf.mxu0
    %v243 = vadd.f32 %v196, %v242
    %v244 = vpop.f32.mrf.mxu0
    %245 = vdwg.mxu0
    %v246 = vmax.f32 %v240, 0.0
    %v247 = vmax.f32 %v243, 0.0
    %v248 = vpack.c.bf16 %v247, %v246
    %v249 = vld [vmem:[%s1 + $0x58] sm:$0xff]
    %v250 = vpack.c.bf16 %v249, %v249
    %v251 = vld [vmem:[%s1 + $0x60] sm:$0x1]
    %v252 = vlaneseq
    %v253 = vshrl.u32 %v252, 7
    %v254 = vsub.s32 0, %v253
    %v255 = vrot.slane %v251, %v254
    %v257 = vsel %vm138, %v248, 0
    %v260 = vsel %vm142, %v250, 0
    %262 = vmatprep.subr.bf16.mxu0 0
    %263 = vmatpush1.bf16.msra.mxu0 0
    %264 = vmatprep.subr.bf16.mxu0 0
    %265 = vmatpush1.bf16.msra.mxu0 0
    %266 = vmatprep.subr.bf16.mxu0 0
    %267 = vmatpush1.bf16.msra.mxu0 0
    %268 = vmatprep.subr.bf16.mxu0 0
    %269 = vmatpush1.bf16.msra.mxu0 0
    %270 = vmatprep.subr.bf16.mxu0 0
    %271 = vmatpush1.bf16.msra.mxu0 0
    %272 = vmatprep.subr.bf16.mxu0 0
    %273 = vmatpush1.bf16.msra.mxu0 0
    %274 = vmatprep.subr.bf16.mxu0 0
    %275 = vmatpush1.bf16.msra.mxu0 0
    %276 = vmatprep.subr.bf16.mxu0 0
    %277 = vmatpush1.bf16.msra.mxu0 %v260
    %278 = vmatprep.subr.bf16.mxu0 0
    %279 = vmatpush2.bf16.msra.mxu0 0
    %280 = vmatprep.subr.bf16.mxu0 0
    %281 = vmatpush2.bf16.msra.mxu0 0
    %282 = vmatprep.subr.bf16.mxu0 0
    %283 = vmatpush2.bf16.msra.mxu0 0
    %284 = vmatprep.subr.bf16.mxu0 0
    %285 = vmatpush2.bf16.msra.mxu0 0
    %286 = vmatprep.subr.bf16.mxu0 0
    %287 = vmatpush2.bf16.msra.mxu0 0
    %288 = vmatprep.subr.bf16.mxu0 0
    %289 = vmatpush2.bf16.msra.mxu0 0
    %290 = vmatprep.subr.bf16.mxu0 0
    %291 = vmatpush2.bf16.msra.mxu0 0
    %292 = vmatprep.subr.bf16.mxu0 0
    %293 = vmatpush2.bf16.msra.mxu0 0
    %294 = vmatprep.mubr.bf16.mxu0 0
    %295 = vmatmul.mubr.bf16.gmra.mxu0 %v257
    %v296 = vpop.f32.mrf.mxu0
    %v297 = vadd.f32 %v255, %v296
    %v298 = vpop.f32.mrf.mxu0
    %v299 = vpop.f32.mrf.mxu0
    %v300 = vadd.f32 %v255, %v299
    %v301 = vpop.f32.mrf.mxu0
    %302 = vdwg.mxu0
    %v303 = vmax.f32 %v297, 0.0
    %v304 = vmax.f32 %v300, 0.0
    %v305 = vpack.c.bf16 %v304, %v303
    %v306 = vld [vmem:[%s1 + $0x68] sm:$0xff]
    %v307 = vld [vmem:[%s1 + $0x70] sm:$0xff]
    %v308 = vpack.c.bf16 %v307, %v306
    %v309 = vld [vmem:[%s1 + $0x78] sm:$0x1]
    %v310 = vlaneseq
    %v311 = vshrl.u32 %v310, 7
    %v312 = vsub.s32 0, %v311
    %v313 = vrot.slane %v309, %v312
    %v315 = vsel %vm83, %v305, 0
    %317 = vmatprep.subr.bf16.mxu0 0
    %318 = vmatpush1.bf16.msra.mxu0 0
    %319 = vmatprep.subr.bf16.mxu0 0
    %320 = vmatpush1.bf16.msra.mxu0 0
    %321 = vmatprep.subr.bf16.mxu0 0
    %322 = vmatpush1.bf16.msra.mxu0 0
    %323 = vmatprep.subr.bf16.mxu0 0
    %324 = vmatpush1.bf16.msra.mxu0 0
    %325 = vmatprep.subr.bf16.mxu0 0
    %326 = vmatpush1.bf16.msra.mxu0 0
    %327 = vmatprep.subr.bf16.mxu0 0
    %328 = vmatpush1.bf16.msra.mxu0 0
    %329 = vmatprep.subr.bf16.mxu0 0
    %330 = vmatpush1.bf16.msra.mxu0 0
    %331 = vmatprep.subr.bf16.mxu0 0
    %332 = vmatpush1.bf16.msra.mxu0 %v308
    %333 = vmatprep.subr.bf16.mxu0 0
    %334 = vmatpush2.bf16.msra.mxu0 0
    %335 = vmatprep.subr.bf16.mxu0 0
    %336 = vmatpush2.bf16.msra.mxu0 0
    %337 = vmatprep.subr.bf16.mxu0 0
    %338 = vmatpush2.bf16.msra.mxu0 0
    %339 = vmatprep.subr.bf16.mxu0 0
    %340 = vmatpush2.bf16.msra.mxu0 0
    %341 = vmatprep.subr.bf16.mxu0 0
    %342 = vmatpush2.bf16.msra.mxu0 0
    %343 = vmatprep.subr.bf16.mxu0 0
    %344 = vmatpush2.bf16.msra.mxu0 0
    %345 = vmatprep.subr.bf16.mxu0 0
    %346 = vmatpush2.bf16.msra.mxu0 0
    %347 = vmatprep.subr.bf16.mxu0 0
    %348 = vmatpush2.bf16.msra.mxu0 0
    %349 = vmatprep.mubr.bf16.mxu0 0
    %350 = vmatmul.mubr.bf16.gmra.mxu0 %v315
    %v351 = vpop.f32.mrf.mxu0
    %v352 = vadd.f32 %v313, %v351
    %v353 = vpop.f32.mrf.mxu0
    %v354 = vpop.f32.mrf.mxu0
    %v355 = vadd.f32 %v313, %v354
    %v356 = vpop.f32.mrf.mxu0
    %357 = vdwg.mxu0
    %v358 = vxor.u32 %v352, 2147483648
    %v359 = vxor.u32 %v355, 2147483648
    %v360 = vmul.f32 %v358, 1.442695
    %v361 = vpow.pop %v360
    %v362 = vmul.f32 %v359, 1.442695
    %v363 = vpow.pop %v362
    %v364 = vadd.f32 %v361, 1.0
    %v365 = vadd.f32 %v363, 1.0
    %v366 = vrcp.pop %v364
    %v367 = vmul.f32 1.0, %v366
    %v368 = vrcp.pop %v365
    %v369 = vmul.f32 1.0, %v368
    %370 = vst.msk [vmem:[#allocation2] sm:$0xff] %vm27, %v367
    %371 = vst.msk [vmem:[#allocation2 + $0x8] sm:$0xff] %vm27, %v369
    // Predicated region
    $region10: #{anomaly_detector_forward.1} parent=1 // pred_check
      _
    $region11: #{anomaly_detector_forward.1} parent=1 // pred_check_branch
      %373 = sbr.rel (0) target = $region13
    $region12: #{anomaly_detector_forward.1} parent=1 // pred_region
      %s375 = ssub.s32 256, 256
      %376 = vsyncadd [#allocation3], %s375
      %s377 = sshll.u32 [#allocation2], 4
      %s378 = int_to_ptr.vmem [resolvable:$true] %s377
      %383 = dma.vmem_to_hbm [thread:$0]  %s378, 256, %s2, [#allocation3], 128, 128, 8
    $region13: #{anomaly_detector_forward.1} parent=1 // pred_fallthru
      _
    // Predicated region
    $region14: #{anomaly_detector_forward.1} parent=1 // pred_check
      _
    $region15: #{anomaly_detector_forward.1} parent=1 // pred_check_branch
      %385 = sbr.rel (0) target = $region17
    $region16: #{anomaly_detector_forward.1} parent=1 // pred_region
      %386 = dma.done [#allocation3], 256
    $region17: #{anomaly_detector_forward.1} parent=1 // pred_fallthru
      _
    %387 = vsyncpa [#allocation3], 1

</llo_original>
